<compile_context>
chip_gen: v7x
topology: tpu7x:2x2x1
jax: 0.10.0
libtpu: 0.0.40
codegen_flags: <defaults>
</compile_context>

<pallas_src>
import jax
import jax.numpy as jnp
import numpy as np
from jax import lax
from jax.experimental import pallas as pl
from jax.experimental.pallas import tpu as pltpu

EPS = 1e-6


def layernorm_kernel(x_ref, alpha_ref, beta_ref, o_ref):
    """Rowwise custom LayerNorm on a (block_rows, H) VMEM tile.

    y = (x - mean) / sqrt(std + eps) * alpha + beta, with unbiased std.
    Single fused pass: sum(x) and sum(x*x) computed together; rsqrt on EUP.
    """
    x = x_ref[...].astype(jnp.float32)
    h = x.shape[-1]
    s1 = jnp.sum(x, axis=-1, keepdims=True)
    s2 = jnp.sum(x * x, axis=-1, keepdims=True)
    mean = s1 * (1.0 / h)
    # Unbiased (Bessel-corrected) variance; clamp tiny negative cancellation.
    var = jnp.maximum((s2 - s1 * mean) * (1.0 / max(h - 1, 1)), 0.0)
    std = jnp.sqrt(var)
    scale = lax.rsqrt(std + jnp.float32(EPS)) * alpha_ref[0]
    o_ref[...] = ((x - mean) * scale + beta_ref[0]).astype(o_ref.dtype)


def _sublane(dtype):
    # Minimum second-to-last tile dim per dtype: f32 -> 8, bf16 -> 16, i8 -> 32.
    return max(8, 32 // jnp.dtype(dtype).itemsize)


def encoder_forward(x, mask, alpha, beta, *,
                    max_block_rows=1024,
                    target_tile_bytes=2 * 1024 * 1024):
    """Encoder forward.  x: [B, S, H].  `mask` would only be consumed by the
    external sub-layers, which are identity here, so it is unused."""
    del mask
    B, S, H = x.shape
    rows = B * S
    x2 = x.reshape(rows, H)

    itemsize = jnp.dtype(x.dtype).itemsize
    sub = _sublane(x.dtype)

    # Largest row tile within the per-buffer VMEM budget, aligned to the dtype
    # sublane multiple.  Loads/stores stay in the input dtype (bf16 halves HBM
    # traffic); compute is cast to f32 inside the kernel.
    br = max(sub, min(max_block_rows, target_tile_bytes // max(1, H * itemsize)))
    br = (br // sub) * sub
    if br >= rows:
        br = rows  # single block covering everything (full-extent is legal)
    grid = (pl.cdiv(rows, br),)  # partial trailing block handled by Pallas

    # input + output, double-buffered, plus headroom.  Only raise the scoped
    # VMEM limit when the most conservative default (16 MiB on v5e) won't fit;
    # cap well under v7x's 64 MiB physical VMEM.
    tile_bytes = br * H * itemsize
    vmem_need = 4 * tile_bytes + (1 << 20)
    vmem_limit = None if vmem_need <= (16 << 20) else min(2 * vmem_need, 40 << 20)

    out = pl.pallas_call(
        layernorm_kernel,
        out_shape=jax.ShapeDtypeStruct((rows, H), x.dtype),
        grid_spec=pltpu.PrefetchScalarGridSpec(
            num_scalar_prefetch=0,
            grid=grid,
            in_specs=[
                # Lane-dense when H % 128 == 0 (recommended deployment layout).
                pl.BlockSpec((br, H), lambda i: (i, 0)),
                pl.BlockSpec(memory_space=pltpu.SMEM),  # alpha (1,)
                pl.BlockSpec(memory_space=pltpu.SMEM),  # beta  (1,)
            ],
            out_specs=pl.BlockSpec((br, H), lambda i: (i, 0)),
        ),
        compiler_params=pltpu.CompilerParams(
            dimension_semantics=("parallel",),  # row tiles shard across TCs (v7x)
            vmem_limit_bytes=vmem_limit,
        ),
    )(x2, alpha, beta)
    return out.reshape(B, S, H)


def encoder_reference(x, alpha, beta):
    x = x.astype(jnp.float32)
    mean = jnp.mean(x, axis=-1, keepdims=True)
    diff = x - mean
    var = jnp.sum(diff * diff, axis=-1, keepdims=True) / (x.shape[-1] - 1)
    std = jnp.sqrt(var)
    return diff / jnp.sqrt(std + EPS) * alpha[0] + beta[0]


def _check(x, mask, alpha, beta, **kw):
    y = jax.block_until_ready(encoder_forward(x, mask, alpha, beta, **kw))
    y_ref = encoder_reference(x, alpha, beta)
    np.testing.assert_allclose(np.asarray(y, dtype=np.float32),
                               np.asarray(y_ref), rtol=5e-5, atol=1e-5)


if __name__ == "__main__":
    key = jax.random.PRNGKey(0)
    k1, k2, k3 = jax.random.split(key, 3)

    # LayerNorm parameters as in __init__: alpha = ones(1), beta = zeros(1)
    alpha = jnp.ones((1,), dtype=jnp.float32)
    beta = jnp.zeros((1,), dtype=jnp.float32)

    # Primary small example: hidden is a multiple of 128 -> lane-dense stores.
    B, S, H = 2, 8, 128
    x = jax.random.normal(k1, (B, S, H), dtype=jnp.float32)
    mask = jnp.ones((B, 1, S, S), dtype=jnp.float32)  # unused (layers identity)
    _check(x, mask, alpha, beta)

    # Small hidden (H=32): block last dim equals the full H extent.
    x_small = jax.random.normal(k2, (2, 8, 32), dtype=jnp.float32)
    _check(x_small, None, alpha, beta)

    # Row count not a multiple of the block size: exercises the pl.cdiv grid
    # with a partial trailing block (1040 rows, 1024-row blocks).
    x_ragged = jax.random.normal(k3, (2, 520, 128), dtype=jnp.float32)
    _check(x_ragged, None, alpha, beta)

    print("KERNEL_OK")
</pallas_src>

<mosaic_0001>
module attributes {stable_mosaic.version = 11 : i64} {
  func.func @layernorm_kernel(%arg0: i32, %arg1: memref<16x128xf32, #tpu.memory_space<vmem>>, %arg2: memref<1xf32, #tpu.memory_space<smem>>, %arg3: memref<1xf32, #tpu.memory_space<smem>>, %arg4: memref<16x128xf32, #tpu.memory_space<vmem>>) attributes {dimension_semantics = [#tpu.dimension_semantics<parallel>], iteration_bounds = array<i64: 1>, scalar_prefetch = 0 : i64, scratch_operands = 0 : i64, tpu.core_type = #tpu.core_type<tc>, window_params = [{transform_indices = @transform_0, window_bounds = array<i64: 16, 128>}, {transform_indices = @transform_1, window_bounds = array<i64: 1>}, {transform_indices = @transform_2, window_bounds = array<i64: 1>}, {transform_indices = @transform_3, window_bounds = array<i64: 16, 128>}]} {
    %c0 = arith.constant 0 : index
    %c0_0 = arith.constant 0 : index
    %0 = vector.load %arg1[%c0, %c0_0] : memref<16x128xf32, #tpu.memory_space<vmem>>, vector<16x128xf32>
    %cst = arith.constant dense<0.000000e+00> : vector<16xf32>
    %1 = vector.multi_reduction <add>, %0, %cst [1] : vector<16x128xf32> to vector<16xf32>
    %2 = vector.shape_cast %1 : vector<16xf32> to vector<16x1xf32>
    %3 = arith.mulf %0, %0 : vector<16x128xf32>
    %cst_1 = arith.constant dense<0.000000e+00> : vector<16xf32>
    %4 = vector.multi_reduction <add>, %3, %cst_1 [1] : vector<16x128xf32> to vector<16xf32>
    %5 = vector.shape_cast %4 : vector<16xf32> to vector<16x1xf32>
    %cst_2 = arith.constant 7.812500e-03 : f32
    %6 = vector.broadcast %cst_2 : f32 to vector<16x1xf32>
    %7 = arith.mulf %2, %6 : vector<16x1xf32>
    %8 = arith.mulf %2, %7 : vector<16x1xf32>
    %9 = arith.subf %5, %8 : vector<16x1xf32>
    %cst_3 = arith.constant 0.00787401571 : f32
    %10 = vector.broadcast %cst_3 : f32 to vector<16x1xf32>
    %11 = arith.mulf %9, %10 : vector<16x1xf32>
    %cst_4 = arith.constant 0.000000e+00 : f32
    %12 = vector.broadcast %cst_4 : f32 to vector<16x1xf32>
    %13 = arith.maximumf %11, %12 : vector<16x1xf32>
    %14 = math.sqrt %13 : vector<16x1xf32>
    %cst_5 = arith.constant 9.99999997E-7 : f32
    %15 = vector.broadcast %cst_5 : f32 to vector<16x1xf32>
    %16 = arith.addf %14, %15 : vector<16x1xf32>
    %17 = math.rsqrt %16 : vector<16x1xf32>
    %c0_6 = arith.constant 0 : index
    %18 = memref.load %arg2[%c0_6] : memref<1xf32, #tpu.memory_space<smem>>
    %19 = vector.broadcast %18 : f32 to vector<16x1xf32>
    %20 = arith.mulf %17, %19 : vector<16x1xf32>
    %21 = vector.broadcast %7 : vector<16x1xf32> to vector<16x128xf32>
    %22 = arith.subf %0, %21 : vector<16x128xf32>
    %23 = vector.broadcast %20 : vector<16x1xf32> to vector<16x128xf32>
    %24 = arith.mulf %22, %23 : vector<16x128xf32>
    %c0_7 = arith.constant 0 : index
    %25 = memref.load %arg3[%c0_7] : memref<1xf32, #tpu.memory_space<smem>>
    %26 = vector.broadcast %25 : f32 to vector<16x128xf32>
    %27 = arith.addf %24, %26 : vector<16x128xf32>
    %c0_8 = arith.constant 0 : index
    %c0_9 = arith.constant 0 : index
    %28 = vector.load %arg4[%c0_8, %c0_9] : memref<16x128xf32, #tpu.memory_space<vmem>>, vector<16x128xf32>
    tpu.vector_store %arg4[%c0_8, %c0_9], %27 {strides = array<i32>} : memref<16x128xf32, #tpu.memory_space<vmem>>, vector<16x128xf32>,
    return
  }
  func.func @transform_0(%arg0: i32) -> (i32, i32) {
    %c0_i32 = arith.constant 0 : i32
    %c0_i32_0 = arith.constant 0 : i32
    return %arg0, %c0_i32 : i32, i32
  }
  func.func @transform_1(%arg0: i32) -> i32 {
    %c0_i32 = arith.constant 0 : i32
    %c0_i32_0 = arith.constant 0 : i32
    return %c0_i32 : i32
  }
  func.func @transform_2(%arg0: i32) -> i32 {
    %c0_i32 = arith.constant 0 : i32
    %c0_i32_0 = arith.constant 0 : i32
    return %c0_i32 : i32
  }
  func.func @transform_3(%arg0: i32) -> (i32, i32) {
    %c0_i32 = arith.constant 0 : i32
    %c0_i32_0 = arith.constant 0 : i32
    return %arg0, %c0_i32 : i32, i32
  }
}

</mosaic_0001>

<llo_original>
// kernel: tpu_custom_call.1
$region0: #{tpu_custom_call.1}
  #allocation0 [shape = 'u32[]', space=smem, size = 0x4, offset = 0x4, fixed_abs, tag = 'smem constant byte address 0x4 - core index']
  #allocation1 [shape = 'u32[144,128]{1,0:T(1,128)}', space=vmem, size = 0x12000, scoped, tag = 'internal scratch']
  #allocation2 [shape = 'f32[1]{0:T(128)S(6)}', space=smem, size = 0x200, scoped, tag = 'scoped memory for tpu_custom_call.1']
  #allocation3 [shape = 'f32[1]{0:T(128)S(6)}', space=smem, size = 0x200, scoped, tag = 'scoped memory for tpu_custom_call.1']
  %s0 = inlined_call_operand.hbm [shape: f32[16,128], index: 0, kind: input, shape index: {}]
  %s1 = inlined_call_operand.<no memory space> [shape: f32[1], index: 1, kind: input, shape index: {}]
  %s2 = inlined_call_operand.<no memory space> [shape: f32[1], index: 2, kind: input, shape index: {}]
  %s3 = inlined_call_operand.hbm [shape: f32[16,128], index: 3, kind: output, shape index: {}]
  %s4 = sld [smem:[#allocation0]]
  $region26: #{tpu_custom_call.1} parent=0
    _
  %s6 = ssub.s32 1, %s4
  %s7 = scalar_select 0, %s6, %s4
  %8 = sst [smem:[#allocation2]] %s1
  %9 = sst [smem:[#allocation3]] %s2
  $region1: #{tpu_custom_call.1} parent=0
    #allocation4 [shape = 'u8[8192]{0}', space=vmem, size = 0x2000, scoped, tag = 'input window, operand 0, single buffered']
    #allocation5 [shape = 's32[1]{0}', space=sflag, size = 0x4, scoped, tag = 'scoped memory for tpu_custom_call.1']
    #allocation6 [shape = 's32[1]{0}', space=sflag, size = 0x4, scoped, tag = 'scoped memory for tpu_custom_call.1']
    #allocation7 [shape = 'u8[8192]{0}', space=vmem, size = 0x2000, scoped, tag = 'output window, operand 0, single buffered']
    %10 = vsyncpa [#allocation5], 0
    %11 = vsyncpa [#allocation6], 0
    // Predicated region
    $region2: #{tpu_custom_call.1} parent=1 // pred_check
      _
    $region3: #{tpu_custom_call.1} parent=1 // pred_check_branch
      %13 = sbr.rel (0) target = $region5
    $region4: #{tpu_custom_call.1} parent=1 // pred_region
      %s15 = ssub.s32 256, 256
      %16 = vsyncadd [#allocation5], %s15
      %s17 = sshll.u32 [#allocation4], 4
      %s18 = int_to_ptr.vmem [resolvable:$true] %s17
      %23 = dma.hbm_to_vmem [thread:$0]  %s0, 256, %s18, [#allocation5], 128, 128, 8
    $region5: #{tpu_custom_call.1} parent=1 // pred_fallthru
      _
    // Predicated region
    $region6: #{tpu_custom_call.1} parent=1 // pred_check
      _
    $region7: #{tpu_custom_call.1} parent=1 // pred_check_branch
      %25 = sbr.rel (0) target = $region9
    $region8: #{tpu_custom_call.1} parent=1 // pred_region
      _
    $region9: #{tpu_custom_call.1} parent=1 // pred_fallthru
      _
    // Predicated region
    $region10: #{tpu_custom_call.1} parent=1 // pred_check
      _
    $region11: #{tpu_custom_call.1} parent=1 // pred_check_branch
      %27 = sbr.rel (0) target = $region13
    $region12: #{tpu_custom_call.1} parent=1 // pred_region
      _
    $region13: #{tpu_custom_call.1} parent=1 // pred_fallthru
      _
    // Predicated region
    $region14: #{tpu_custom_call.1} parent=1 // pred_check
      _
    $region15: #{tpu_custom_call.1} parent=1 // pred_check_branch
      %29 = sbr.rel (0) target = $region17
    $region16: #{tpu_custom_call.1} parent=1 // pred_region
      %30 = dma.done [#allocation5], 256
    $region17: #{tpu_custom_call.1} parent=1 // pred_fallthru
      _
    %v31 = vld [vmem:[#allocation4] sm:$0xff]
    %v32 = vld [vmem:[#allocation4 + $0x8] sm:$0xff]
    %33 = vadd.xlane.f32.xlu0 %v31
    %v34 = vpop.xlane.xlu0 %33
    %35 = vadd.xlane.f32.xlu0 %v32
    %v36 = vpop.xlane.xlu0 %35
    %v37 = vmul.f32 %v31, %v31
    %v38 = vmul.f32 %v32, %v32
    %39 = vadd.xlane.f32.xlu0 %v37
    %v40 = vpop.xlane.xlu0 %39
    %41 = vadd.xlane.f32.xlu0 %v38
    %v42 = vpop.xlane.xlu0 %41
    %v43 = vmul.f32 %v34, 0.0078125
    %v44 = vmul.f32 %v36, 0.0078125
    %v45 = vmul.f32 %v34, %v43
    %v46 = vmul.f32 %v36, %v44
    %v47 = vsub.f32 %v40, %v45
    %v48 = vsub.f32 %v42, %v46
    %v49 = vmul.f32 %v47, 0.007874016
    %v50 = vmul.f32 %v48, 0.007874016
    %v51 = vmax.f32 %v49, 0.0
    %v52 = vmax.f32 %v50, 0.0
    %v53 = vrsqrt.pop %v51
    %v54 = vmul.f32 %v51, %v53
    %vm55 = vcmp.eq.f32.partialorder %v51, inf
    %v56 = vsel %vm55, %v51, %v54
    %vm57 = vcmp.eq.f32.partialorder %v51, 0.0
    %v58 = vand.u32 %v51, 2147483648
    %v59 = vsel %vm57, %v58, %v56
    %v60 = vrsqrt.pop %v52
    %v61 = vmul.f32 %v52, %v60
    %vm62 = vcmp.eq.f32.partialorder %v52, inf
    %v63 = vsel %vm62, %v52, %v61
    %vm64 = vcmp.eq.f32.partialorder %v52, 0.0
    %v65 = vand.u32 %v52, 2147483648
    %v66 = vsel %vm64, %v65, %v63
    %v67 = vadd.f32 %v59, 1e-06
    %v68 = vadd.f32 %v66, 1e-06
    %v69 = vrsqrt.pop %v67
    %v70 = vrsqrt.pop %v68
    %s71 = sld [smem:[#allocation2]]
    %v72 = vstv %s71
    %v73 = vmul.f32 %v69, %v72
    %v74 = vmul.f32 %v70, %v72
    %v75 = vsub.f32 %v31, %v43
    %v76 = vsub.f32 %v32, %v44
    %v77 = vmul.f32 %v75, %v73
    %v78 = vmul.f32 %v76, %v74
    %s79 = sld [smem:[#allocation3]]
    %v80 = vstv %s79
    %v81 = vadd.f32 %v77, %v80
    %v82 = vadd.f32 %v78, %v80
    %83 = vst [vmem:[#allocation7] sm:$0xff] %v81
    %84 = vst [vmem:[#allocation7 + $0x8] sm:$0xff] %v82
    // Predicated region
    $region18: #{tpu_custom_call.1} parent=1 // pred_check
      _
    $region19: #{tpu_custom_call.1} parent=1 // pred_check_branch
      %86 = sbr.rel (0) target = $region21
    $region20: #{tpu_custom_call.1} parent=1 // pred_region
      %s88 = ssub.s32 256, 256
      %89 = vsyncadd [#allocation6], %s88
      %s90 = sshll.u32 [#allocation7], 4
      %s91 = int_to_ptr.vmem [resolvable:$true] %s90
      %96 = dma.vmem_to_hbm [thread:$0]  %s91, 256, %s3, [#allocation6], 128, 128, 8
    $region21: #{tpu_custom_call.1} parent=1 // pred_fallthru
      _
    // Predicated region
    $region22: #{tpu_custom_call.1} parent=1 // pred_check
      _
    $region23: #{tpu_custom_call.1} parent=1 // pred_check_branch
      %98 = sbr.rel (0) target = $region25
    $region24: #{tpu_custom_call.1} parent=1 // pred_region
      %99 = dma.done [#allocation6], 256
    $region25: #{tpu_custom_call.1} parent=1 // pred_fallthru
      _
    %100 = vsyncpa [#allocation5], 1
    %101 = vsyncpa [#allocation6], 1

</llo_original>
